<compile_context>
chip_gen: v7x
topology: tpu7x:2x2x1
jax: 0.10.0
libtpu: 0.0.40
codegen_flags: <defaults>
</compile_context>

<pallas_src>
import functools
import math

import jax
import jax.numpy as jnp
from jax.experimental import pallas as pl
from jax.experimental.pallas import tpu as pltpu

LANE = 128
_VMEM_TARGET = 40 << 20     # design budget for tiling; fits v7x's 64 MiB/TC


def _round_up(a, b):
    return (a + b - 1) // b * b


def _make_mlp_kernel(n_linear):
    """Fused kernel: n_linear hidden layers + out_1 (+ReLU) + out_2 (lane-dense)."""

    def kernel(*refs):
        # refs = [x, (w, b) * n_linear, w_out1, b_out1, w_out2_row, b_out2, o]
        x_ref = refs[0]
        o_ref = refs[-1]
        idx = 1

        h = x_ref[...]                     # (TILE_N, F_pad), compute dtype
        cdt = h.dtype

        # hidden (in_dim -> in_dim) layers with ReLU; f32 accumulation.
        for _ in range(n_linear):
            w = refs[idx][...]             # (F_pad, F_pad), compute dtype
            b = refs[idx + 1][...]         # (1, F_pad), f32
            idx += 2
            y = jnp.dot(h, w, preferred_element_type=jnp.float32) + b
            h = jnp.maximum(y, 0.0).astype(cdt)

        # out_1 (in_dim -> 32, zero-padded to 128) + ReLU, kept f32.
        w1 = refs[idx][...]                # (F_pad, F2_pad), compute dtype
        b1 = refs[idx + 1][...]            # (1, F2_pad), f32
        idx += 2
        h1 = jnp.maximum(
            jnp.dot(h, w1, preferred_element_type=jnp.float32) + b1, 0.0)

        # out_2 (32 -> 1) as a lane-dense (1, TILE_N) block: contract the
        # padded feature axis of h1 against the (1, F2_pad) weight row.
        # (Perf-review item: if a bundle dump ever shows a per-step vxpose of
        #  h1 here, emit out_1 transposed instead; current lowering runs clean
        #  so left as-is.)
        w2 = refs[idx][...]                # (1, F2_pad), f32 (pad cols are 0)
        b2 = refs[idx + 1][...]            # (1, 1), f32
        r = jax.lax.dot_general(
            w2, h1,
            dimension_numbers=(((1,), (1,)), ((), ())),
            preferred_element_type=jnp.float32)          # (1, TILE_N)
        o_ref[...] = (r + b2).astype(o_ref.dtype)

    return kernel


def pad_params(params, in_dim, n_linear, compute_dtype=jnp.bfloat16):
    """Zero-pad parameters to lane-aligned shapes.

    `params` is the flat list [w0, b0, ..., w_out1, b_out1, w_out2, b_out2]
    with weights already in (in, out) layout and biases shaped (1, out)
    (i.e. y = x @ W + b == torch Linear).  Padded columns/rows are zero so
    they cannot contaminate results through bias + ReLU.
    """
    assert len(params) == 2 * (n_linear + 2), "bad param list length"
    F = _round_up(in_dim, LANE)
    F2 = _round_up(32, LANE)
    out = []
    idx = 0
    for _ in range(n_linear):
        w, b = params[idx], params[idx + 1]
        idx += 2
        assert w.shape == (in_dim, in_dim) and b.shape == (1, in_dim), (
            "hidden params must be W:(in,out), b:(1,out)")
        wp = jnp.zeros((F, F), compute_dtype).at[:in_dim, :in_dim].set(
            w.astype(compute_dtype))
        bp = jnp.zeros((1, F), jnp.float32).at[:, :in_dim].set(
            b.astype(jnp.float32))
        out += [wp, bp]
    w1, b1 = params[idx], params[idx + 1]
    idx += 2
    assert w1.shape == (in_dim, 32) and b1.shape == (1, 32)
    w1p = jnp.zeros((F, F2), compute_dtype).at[:in_dim, :32].set(
        w1.astype(compute_dtype))
    b1p = jnp.zeros((1, F2), jnp.float32).at[:, :32].set(b1.astype(jnp.float32))
    w2, b2 = params[idx], params[idx + 1]
    assert w2.shape == (32, 1) and b2.shape == (1, 1)
    w2p = jnp.zeros((1, F2), jnp.float32).at[:, :32].set(
        w2[:, 0].astype(jnp.float32)[None, :])
    b2p = b2.reshape(1, 1).astype(jnp.float32)
    out += [w1p, b1p, w2p, b2p]
    return out


def _weight_spec(shape, single_buffer):
    """Constant-index weight spec; single-buffered when supported."""
    if single_buffer:
        try:
            return pl.BlockSpec(shape, lambda i: (0, 0),
                                pipeline_mode=pl.Buffered(1))
        except (AttributeError, TypeError):
            pass
    return pl.BlockSpec(shape, lambda i: (0, 0))


def mlp_forward(x, padded_params, n_linear, in_dim,
                compute_dtype=jnp.bfloat16, single_buffer_weights=True):
    """x: (N, in_dim).  Returns (1, N) == torch's x.reshape(1, -1)."""
    N = x.shape[0]
    F = _round_up(in_dim, LANE)
    itemsize = jnp.dtype(compute_dtype).itemsize

    # Resident-weight footprint (weights live in VMEM for the whole grid).
    w_bufs = 1 if single_buffer_weights else 2
    weight_bytes = w_bufs * sum(
        math.prod(p.shape) * p.dtype.itemsize for p in padded_params)

    # --- Row tiling --------------------------------------------------------
    row_align = 8 * max(1, 4 // itemsize)          # 8 rows f32, 16 rows bf16
    if N <= 256:
        # Single grid step; pad rows only to the sublane multiple.
        tile_n = _round_up(max(N, 1), row_align)
    else:
        # Lane-aligned tiles sized from the VMEM budget; keep >= ~4 grid steps
        # so v7x's two TensorCores both get work and the pipeline overlaps.
        x_budget = max(_VMEM_TARGET - weight_bytes - (2 << 20), 0)
        per_row = 2 * F * itemsize + 2 * 4 + 3 * F * 4   # x dbl-buf + out + f32 temps
        tile_cap = (x_budget // per_row) // LANE * LANE
        tile_n = int(min(2048, max(LANE, tile_cap)))
        steps_tile = _round_up(pl.cdiv(N, 4), LANE)      # tile giving ~4 steps
        tile_n = max(LANE, min(tile_n, steps_tile))
    n_pad = _round_up(N, tile_n)
    grid = (n_pad // tile_n,)

    # --- Explicit VMEM limit: footprint + headroom, capped at v7x physical.
    footprint = (weight_bytes
                 + 2 * tile_n * F * itemsize          # streamed x double buffer
                 + 2 * tile_n * 4                     # (1, tile_n) f32 out, x2
                 + 3 * tile_n * max(F, LANE) * 4)     # f32 compute temporaries
    vmem_limit = int(min(64 << 20, max(32 << 20, footprint + (8 << 20))))
    # TODO(synk): for very large in_dim / n_linear the all-weights-resident
    # design exceeds v7x's 64 MiB/TC; stream per-layer weight K-tiles with an
    # inner pltpu.emit_pipeline in that regime (and optionally fp8 weights).

    # Zero-pad x only when actually needed (the pad is a full HBM round trip).
    if in_dim != F or N != n_pad:
        xp = jnp.zeros((n_pad, F), compute_dtype).at[:N, :in_dim].set(
            x.astype(compute_dtype))
    elif x.dtype != compute_dtype:
        xp = x.astype(compute_dtype)
    else:
        xp = x

    kernel = _make_mlp_kernel(n_linear)

    # x streams over the row grid; weights use constant index maps (+ single
    # buffering) so they are DMA'd once and stay resident across grid steps.
    in_specs = [pl.BlockSpec((tile_n, F), lambda i: (i, 0))]
    for p in padded_params:
        in_specs.append(_weight_spec(p.shape, single_buffer_weights))

    out = pl.pallas_call(
        kernel,
        out_shape=jax.ShapeDtypeStruct((1, n_pad), jnp.float32),
        grid=grid,
        in_specs=in_specs,
        out_specs=pl.BlockSpec((1, tile_n), lambda i: (0, i)),
        compiler_params=pltpu.CompilerParams(
            dimension_semantics=("parallel",),
            vmem_limit_bytes=vmem_limit),
    )(xp, *padded_params)

    return out[:, :N]


def init_params(key, in_dim, n_linear):
    """Deterministic init mimicking torch.nn.Linear; weights stored (in, out)."""
    params = []
    dims = [(in_dim, in_dim)] * n_linear + [(in_dim, 32), (32, 1)]
    for (d_in, d_out) in dims:
        key, kw, kb = jax.random.split(key, 3)
        bound = 1.0 / jnp.sqrt(d_in)
        w = jax.random.uniform(kw, (d_in, d_out), jnp.float32, -bound, bound)
        b = jax.random.uniform(kb, (1, d_out), jnp.float32, -bound, bound)
        params += [w, b]
    return params


def reference_forward(x, params, n_linear):
    """Pure-JAX reference (matches the torch module with act='relu')."""
    h = x
    idx = 0
    for _ in range(n_linear):
        h = jnp.maximum(h @ params[idx] + params[idx + 1], 0.0)
        idx += 2
    h = jnp.maximum(h @ params[idx] + params[idx + 1], 0.0)
    idx += 2
    h = h @ params[idx] + params[idx + 1]
    return h.reshape(1, -1)


if __name__ == "__main__":
    # Small shapes consistent with the module: N graph nodes, in_dim features.
    N = 8
    in_dim = 64
    n_linear = 2          # number of hidden Linear(in_dim, in_dim) layers
    # act = "relu"        # getattr(F, act) -> F.relu

    key = jax.random.PRNGKey(0)
    key, kx = jax.random.split(key)
    x = jax.random.normal(kx, (N, in_dim), jnp.float32)
    params = init_params(key, in_dim, n_linear)

    ref = reference_forward(x, params, n_linear)

    def build_fwd(cdt, single_buf):
        return jax.jit(functools.partial(
            mlp_forward, n_linear=n_linear, in_dim=in_dim,
            compute_dtype=cdt, single_buffer_weights=single_buf))

    # f32 path: exact match with the reference.
    pp32 = pad_params(params, in_dim, n_linear, jnp.float32)

    def run_f32(single_buf):
        out = build_fwd(jnp.float32, single_buf)(x, pp32)
        jax.block_until_ready(out)
        assert out.shape == (1, N), out.shape
        assert jnp.allclose(out, ref, atol=1e-5, rtol=1e-5), "f32 mismatch"
        return out

    single_buf = True
    try:
        out32 = run_f32(True)
    except Exception:
        # This jax build rejects single-buffered weight specs (or the lowering
        # misbehaved): fall back to default double-buffered weights.
        single_buf = False
        out32 = run_f32(False)

    # bf16 default path (MXU-native on every TPU generation): bf16 x / hidden
    # weights, f32 accumulation and f32 biases.
    pp16 = pad_params(params, in_dim, n_linear, jnp.bfloat16)
    out16 = build_fwd(jnp.bfloat16, single_buf)(x, pp16)
    jax.block_until_ready(out16)
    assert out16.shape == (1, N), out16.shape
    assert jnp.allclose(out16, ref, atol=5e-2, rtol=5e-2), "bf16 mismatch"

    print("KERNEL_OK")
</pallas_src>

<mosaic_0001>
module attributes {stable_mosaic.version = 11 : i64} {
  func.func @kernel(%arg0: i32, %arg1: memref<8x128xf32, #tpu.memory_space<vmem>>, %arg2: memref<128x128xf32, #tpu.memory_space<vmem>>, %arg3: memref<1x128xf32, #tpu.memory_space<vmem>>, %arg4: memref<128x128xf32, #tpu.memory_space<vmem>>, %arg5: memref<1x128xf32, #tpu.memory_space<vmem>>, %arg6: memref<128x128xf32, #tpu.memory_space<vmem>>, %arg7: memref<1x128xf32, #tpu.memory_space<vmem>>, %arg8: memref<1x128xf32, #tpu.memory_space<vmem>>, %arg9: memref<1x1xf32, #tpu.memory_space<vmem>>, %arg10: memref<1x8xf32, #tpu.memory_space<vmem>>) attributes {dimension_semantics = [#tpu.dimension_semantics<parallel>], iteration_bounds = array<i64: 1>, scalar_prefetch = 0 : i64, scratch_operands = 0 : i64, tpu.core_type = #tpu.core_type<tc>, window_params = [{transform_indices = @transform_0, window_bounds = array<i64: 8, 128>}, {pipeline_mode = #tpu.pipeline_mode<synchronous>, transform_indices = @transform_1, window_bounds = array<i64: 128, 128>}, {pipeline_mode = #tpu.pipeline_mode<synchronous>, transform_indices = @transform_2, window_bounds = array<i64: 1, 128>}, {pipeline_mode = #tpu.pipeline_mode<synchronous>, transform_indices = @transform_3, window_bounds = array<i64: 128, 128>}, {pipeline_mode = #tpu.pipeline_mode<synchronous>, transform_indices = @transform_4, window_bounds = array<i64: 1, 128>}, {pipeline_mode = #tpu.pipeline_mode<synchronous>, transform_indices = @transform_5, window_bounds = array<i64: 128, 128>}, {pipeline_mode = #tpu.pipeline_mode<synchronous>, transform_indices = @transform_6, window_bounds = array<i64: 1, 128>}, {pipeline_mode = #tpu.pipeline_mode<synchronous>, transform_indices = @transform_7, window_bounds = array<i64: 1, 128>}, {pipeline_mode = #tpu.pipeline_mode<synchronous>, transform_indices = @transform_8, window_bounds = array<i64: 1, 1>}, {transform_indices = @transform_9, window_bounds = array<i64: 1, 8>}]} {
    %c0 = arith.constant 0 : index
    %c0_0 = arith.constant 0 : index
    %0 = vector.load %arg1[%c0, %c0_0] : memref<8x128xf32, #tpu.memory_space<vmem>>, vector<8x128xf32>
    %c0_1 = arith.constant 0 : index
    %c0_2 = arith.constant 0 : index
    %1 = vector.load %arg2[%c0_1, %c0_2] : memref<128x128xf32, #tpu.memory_space<vmem>>, vector<128x128xf32>
    %c0_3 = arith.constant 0 : index
    %c0_4 = arith.constant 0 : index
    %2 = vector.load %arg3[%c0_3, %c0_4] : memref<1x128xf32, #tpu.memory_space<vmem>>, vector<1x128xf32>
    %cst = arith.constant dense<0.000000e+00> : vector<8x128xf32>
    %3 = tpu.matmul %0, %1, %cst {dimension_numbers = #tpu.dot_dimension_numbers<[1], [0], [0], [1], [0, 0, 1, 1], [], []>} : vector<8x128xf32>, vector<128x128xf32>, vector<8x128xf32> -> vector<8x128xf32>
    %4 = vector.broadcast %2 : vector<1x128xf32> to vector<8x128xf32>
    %5 = arith.addf %3, %4 : vector<8x128xf32>
    %cst_5 = arith.constant 0.000000e+00 : f32
    %6 = vector.broadcast %cst_5 : f32 to vector<8x128xf32>
    %7 = arith.maximumf %5, %6 : vector<8x128xf32>
    %c0_6 = arith.constant 0 : index
    %c0_7 = arith.constant 0 : index
    %8 = vector.load %arg4[%c0_6, %c0_7] : memref<128x128xf32, #tpu.memory_space<vmem>>, vector<128x128xf32>
    %c0_8 = arith.constant 0 : index
    %c0_9 = arith.constant 0 : index
    %9 = vector.load %arg5[%c0_8, %c0_9] : memref<1x128xf32, #tpu.memory_space<vmem>>, vector<1x128xf32>
    %cst_10 = arith.constant dense<0.000000e+00> : vector<8x128xf32>
    %10 = tpu.matmul %7, %8, %cst_10 {dimension_numbers = #tpu.dot_dimension_numbers<[1], [0], [0], [1], [0, 0, 1, 1], [], []>} : vector<8x128xf32>, vector<128x128xf32>, vector<8x128xf32> -> vector<8x128xf32>
    %11 = vector.broadcast %9 : vector<1x128xf32> to vector<8x128xf32>
    %12 = arith.addf %10, %11 : vector<8x128xf32>
    %cst_11 = arith.constant 0.000000e+00 : f32
    %13 = vector.broadcast %cst_11 : f32 to vector<8x128xf32>
    %14 = arith.maximumf %12, %13 : vector<8x128xf32>
    %c0_12 = arith.constant 0 : index
    %c0_13 = arith.constant 0 : index
    %15 = vector.load %arg6[%c0_12, %c0_13] : memref<128x128xf32, #tpu.memory_space<vmem>>, vector<128x128xf32>
    %c0_14 = arith.constant 0 : index
    %c0_15 = arith.constant 0 : index
    %16 = vector.load %arg7[%c0_14, %c0_15] : memref<1x128xf32, #tpu.memory_space<vmem>>, vector<1x128xf32>
    %cst_16 = arith.constant dense<0.000000e+00> : vector<8x128xf32>
    %17 = tpu.matmul %14, %15, %cst_16 {dimension_numbers = #tpu.dot_dimension_numbers<[1], [0], [0], [1], [0, 0, 1, 1], [], []>} : vector<8x128xf32>, vector<128x128xf32>, vector<8x128xf32> -> vector<8x128xf32>
    %18 = vector.broadcast %16 : vector<1x128xf32> to vector<8x128xf32>
    %19 = arith.addf %17, %18 : vector<8x128xf32>
    %cst_17 = arith.constant 0.000000e+00 : f32
    %20 = vector.broadcast %cst_17 : f32 to vector<8x128xf32>
    %21 = arith.maximumf %19, %20 : vector<8x128xf32>
    %c0_18 = arith.constant 0 : index
    %c0_19 = arith.constant 0 : index
    %22 = vector.load %arg8[%c0_18, %c0_19] : memref<1x128xf32, #tpu.memory_space<vmem>>, vector<1x128xf32>
    %c0_20 = arith.constant 0 : index
    %c0_21 = arith.constant 0 : index
    %23 = vector.load %arg9[%c0_20, %c0_21] : memref<1x1xf32, #tpu.memory_space<vmem>>, vector<1x1xf32>
    %cst_22 = arith.constant dense<0.000000e+00> : vector<1x8xf32>
    %24 = tpu.matmul %22, %21, %cst_22 {dimension_numbers = #tpu.dot_dimension_numbers<[1], [1], [0], [0], [0, 0, 1, 0], [], []>} : vector<1x128xf32>, vector<8x128xf32>, vector<1x8xf32> -> vector<1x8xf32>
    %25 = vector.broadcast %23 : vector<1x1xf32> to vector<1x8xf32>
    %26 = arith.addf %24, %25 : vector<1x8xf32>
    %c0_23 = arith.constant 0 : index
    %c0_24 = arith.constant 0 : index
    %27 = vector.load %arg10[%c0_23, %c0_24] : memref<1x8xf32, #tpu.memory_space<vmem>>, vector<1x8xf32>
    tpu.vector_store %arg10[%c0_23, %c0_24], %26 {strides = array<i32>} : memref<1x8xf32, #tpu.memory_space<vmem>>, vector<1x8xf32>,
    return
  }
  func.func @transform_0(%arg0: i32) -> (i32, i32) {
    %c0_i32 = arith.constant 0 : i32
    %c0_i32_0 = arith.constant 0 : i32
    return %arg0, %c0_i32 : i32, i32
  }
  func.func @transform_1(%arg0: i32) -> (i32, i32) {
    %c0_i32 = arith.constant 0 : i32
    %c0_i32_0 = arith.constant 0 : i32
    %c0_i32_1 = arith.constant 0 : i32
    return %c0_i32, %c0_i32_0 : i32, i32
  }
  func.func @transform_2(%arg0: i32) -> (i32, i32) {
    %c0_i32 = arith.constant 0 : i32
    %c0_i32_0 = arith.constant 0 : i32
    %c0_i32_1 = arith.constant 0 : i32
    return %c0_i32, %c0_i32_0 : i32, i32
  }
  func.func @transform_3(%arg0: i32) -> (i32, i32) {
    %c0_i32 = arith.constant 0 : i32
    %c0_i32_0 = arith.constant 0 : i32
    %c0_i32_1 = arith.constant 0 : i32
    return %c0_i32, %c0_i32_0 : i32, i32
  }
  func.func @transform_4(%arg0: i32) -> (i32, i32) {
    %c0_i32 = arith.constant 0 : i32
    %c0_i32_0 = arith.constant 0 : i32
    %c0_i32_1 = arith.constant 0 : i32
    return %c0_i32, %c0_i32_0 : i32, i32
  }
  func.func @transform_5(%arg0: i32) -> (i32, i32) {
    %c0_i32 = arith.constant 0 : i32
    %c0_i32_0 = arith.constant 0 : i32
    %c0_i32_1 = arith.constant 0 : i32
    return %c0_i32, %c0_i32_0 : i32, i32
  }
  func.func @transform_6(%arg0: i32) -> (i32, i32) {
    %c0_i32 = arith.constant 0 : i32
    %c0_i32_0 = arith.constant 0 : i32
    %c0_i32_1 = arith.constant 0 : i32
    return %c0_i32, %c0_i32_0 : i32, i32
  }
  func.func @transform_7(%arg0: i32) -> (i32, i32) {
    %c0_i32 = arith.constant 0 : i32
    %c0_i32_0 = arith.constant 0 : i32
    %c0_i32_1 = arith.constant 0 : i32
    return %c0_i32, %c0_i32_0 : i32, i32
  }
  func.func @transform_8(%arg0: i32) -> (i32, i32) {
    %c0_i32 = arith.constant 0 : i32
    %c0_i32_0 = arith.constant 0 : i32
    %c0_i32_1 = arith.constant 0 : i32
    return %c0_i32, %c0_i32_0 : i32, i32
  }
  func.func @transform_9(%arg0: i32) -> (i32, i32) {
    %c0_i32 = arith.constant 0 : i32
    %c0_i32_0 = arith.constant 0 : i32
    return %c0_i32, %arg0 : i32, i32
  }
}

module attributes {stable_mosaic.version = 11 : i64} {
  func.func @kernel(%arg0: i32, %arg1: memref<8x128xf32, #tpu.memory_space<vmem>>, %arg2: memref<128x128xf32, #tpu.memory_space<vmem>>, %arg3: memref<1x128xf32, #tpu.memory_space<vmem>>, %arg4: memref<128x128xf32, #tpu.memory_space<vmem>>, %arg5: memref<1x128xf32, #tpu.memory_space<vmem>>, %arg6: memref<128x128xf32, #tpu.memory_space<vmem>>, %arg7: memref<1x128xf32, #tpu.memory_space<vmem>>, %arg8: memref<1x128xf32, #tpu.memory_space<vmem>>, %arg9: memref<1x1xf32, #tpu.memory_space<vmem>>, %arg10: memref<1x8xf32, #tpu.memory_space<vmem>>) attributes {dimension_semantics = [#tpu.dimension_semantics<parallel>], iteration_bounds = array<i64: 1>, scalar_prefetch = 0 : i64, scratch_operands = 0 : i64, tpu.core_type = #tpu.core_type<tc>, window_params = [{transform_indices = @transform_0, window_bounds = array<i64: 8, 128>}, {pipeline_mode = #tpu.pipeline_mode<synchronous>, transform_indices = @transform_1, window_bounds = array<i64: 128, 128>}, {pipeline_mode = #tpu.pipeline_mode<synchronous>, transform_indices = @transform_2, window_bounds = array<i64: 1, 128>}, {pipeline_mode = #tpu.pipeline_mode<synchronous>, transform_indices = @transform_3, window_bounds = array<i64: 128, 128>}, {pipeline_mode = #tpu.pipeline_mode<synchronous>, transform_indices = @transform_4, window_bounds = array<i64: 1, 128>}, {pipeline_mode = #tpu.pipeline_mode<synchronous>, transform_indices = @transform_5, window_bounds = array<i64: 128, 128>}, {pipeline_mode = #tpu.pipeline_mode<synchronous>, transform_indices = @transform_6, window_bounds = array<i64: 1, 128>}, {pipeline_mode = #tpu.pipeline_mode<synchronous>, transform_indices = @transform_7, window_bounds = array<i64: 1, 128>}, {pipeline_mode = #tpu.pipeline_mode<synchronous>, transform_indices = @transform_8, window_bounds = array<i64: 1, 1>}, {transform_indices = @transform_9, window_bounds = array<i64: 1, 8>}]} {
    %c0 = arith.constant 0 : index
    %c0_0 = arith.constant 0 : index
    %0 = vector.load %arg1[%c0, %c0_0] : memref<8x128xf32, #tpu.memory_space<vmem>>, vector<8x128xf32>
    %c0_1 = arith.constant 0 : index
    %c0_2 = arith.constant 0 : index
    %1 = vector.load %arg2[%c0_1, %c0_2] : memref<128x128xf32, #tpu.memory_space<vmem>>, vector<128x128xf32>
    %c0_3 = arith.constant 0 : index
    %c0_4 = arith.constant 0 : index
    %2 = vector.load %arg3[%c0_3, %c0_4] : memref<1x128xf32, #tpu.memory_space<vmem>>, vector<1x128xf32>
    %cst = arith.constant dense<0.000000e+00> : vector<8x128xf32>
    %3 = tpu.matmul %0, %1, %cst {dimension_numbers = #tpu.dot_dimension_numbers<[1], [0], [0], [1], [0, 0, 1, 1], [], []>} : vector<8x128xf32>, vector<128x128xf32>, vector<8x128xf32> -> vector<8x128xf32>
    %4 = vector.broadcast %2 : vector<1x128xf32> to vector<8x128xf32>
    %5 = arith.addf %3, %4 : vector<8x128xf32>
    %cst_5 = arith.constant 0.000000e+00 : f32
    %6 = vector.broadcast %cst_5 : f32 to vector<8x128xf32>
    %7 = arith.maximumf %5, %6 : vector<8x128xf32>
    %c0_6 = arith.constant 0 : index
    %c0_7 = arith.constant 0 : index
    %8 = vector.load %arg4[%c0_6, %c0_7] : memref<128x128xf32, #tpu.memory_space<vmem>>, vector<128x128xf32>
    %c0_8 = arith.constant 0 : index
    %c0_9 = arith.constant 0 : index
    %9 = vector.load %arg5[%c0_8, %c0_9] : memref<1x128xf32, #tpu.memory_space<vmem>>, vector<1x128xf32>
    %cst_10 = arith.constant dense<0.000000e+00> : vector<8x128xf32>
    %10 = tpu.matmul %7, %8, %cst_10 {dimension_numbers = #tpu.dot_dimension_numbers<[1], [0], [0], [1], [0, 0, 1, 1], [], []>} : vector<8x128xf32>, vector<128x128xf32>, vector<8x128xf32> -> vector<8x128xf32>
    %11 = vector.broadcast %9 : vector<1x128xf32> to vector<8x128xf32>
    %12 = arith.addf %10, %11 : vector<8x128xf32>
    %cst_11 = arith.constant 0.000000e+00 : f32
    %13 = vector.broadcast %cst_11 : f32 to vector<8x128xf32>
    %14 = arith.maximumf %12, %13 : vector<8x128xf32>
    %c0_12 = arith.constant 0 : index
    %c0_13 = arith.constant 0 : index
    %15 = vector.load %arg6[%c0_12, %c0_13] : memref<128x128xf32, #tpu.memory_space<vmem>>, vector<128x128xf32>
    %c0_14 = arith.constant 0 : index
    %c0_15 = arith.constant 0 : index
    %16 = vector.load %arg7[%c0_14, %c0_15] : memref<1x128xf32, #tpu.memory_space<vmem>>, vector<1x128xf32>
    %cst_16 = arith.constant dense<0.000000e+00> : vector<8x128xf32>
    %17 = tpu.matmul %14, %15, %cst_16 {dimension_numbers = #tpu.dot_dimension_numbers<[1], [0], [0], [1], [0, 0, 1, 1], [], []>} : vector<8x128xf32>, vector<128x128xf32>, vector<8x128xf32> -> vector<8x128xf32>
    %18 = vector.broadcast %16 : vector<1x128xf32> to vector<8x128xf32>
    %19 = arith.addf %17, %18 : vector<8x128xf32>
    %cst_17 = arith.constant 0.000000e+00 : f32
    %20 = vector.broadcast %cst_17 : f32 to vector<8x128xf32>
    %21 = arith.maximumf %19, %20 : vector<8x128xf32>
    %c0_18 = arith.constant 0 : index
    %c0_19 = arith.constant 0 : index
    %22 = vector.load %arg8[%c0_18, %c0_19] : memref<1x128xf32, #tpu.memory_space<vmem>>, vector<1x128xf32>
    %c0_20 = arith.constant 0 : index
    %c0_21 = arith.constant 0 : index
    %23 = vector.load %arg9[%c0_20, %c0_21] : memref<1x1xf32, #tpu.memory_space<vmem>>, vector<1x1xf32>
    %cst_22 = arith.constant dense<0.000000e+00> : vector<1x8xf32>
    %24 = tpu.matmul %22, %21, %cst_22 {dimension_numbers = #tpu.dot_dimension_numbers<[1], [1], [0], [0], [0, 0, 1, 0], [], []>} : vector<1x128xf32>, vector<8x128xf32>, vector<1x8xf32> -> vector<1x8xf32>
    %25 = vector.broadcast %23 : vector<1x1xf32> to vector<1x8xf32>
    %26 = arith.addf %24, %25 : vector<1x8xf32>
    %c0_23 = arith.constant 0 : index
    %c0_24 = arith.constant 0 : index
    %27 = vector.load %arg10[%c0_23, %c0_24] : memref<1x8xf32, #tpu.memory_space<vmem>>, vector<1x8xf32>
    tpu.vector_store %arg10[%c0_23, %c0_24], %26 {strides = array<i32>} : memref<1x8xf32, #tpu.memory_space<vmem>>, vector<1x8xf32>,
    return
  }
  func.func @transform_0(%arg0: i32) -> (i32, i32) {
    %c0_i32 = arith.constant 0 : i32
    %c0_i32_0 = arith.constant 0 : i32
    return %arg0, %c0_i32 : i32, i32
  }
  func.func @transform_1(%arg0: i32) -> (i32, i32) {
    %c0_i32 = arith.constant 0 : i32
    %c0_i32_0 = arith.constant 0 : i32
    %c0_i32_1 = arith.constant 0 : i32
    return %c0_i32, %c0_i32_0 : i32, i32
  }
  func.func @transform_2(%arg0: i32) -> (i32, i32) {
    %c0_i32 = arith.constant 0 : i32
    %c0_i32_0 = arith.constant 0 : i32
    %c0_i32_1 = arith.constant 0 : i32
    return %c0_i32, %c0_i32_0 : i32, i32
  }
  func.func @transform_3(%arg0: i32) -> (i32, i32) {
    %c0_i32 = arith.constant 0 : i32
    %c0_i32_0 = arith.constant 0 : i32
    %c0_i32_1 = arith.constant 0 : i32
    return %c0_i32, %c0_i32_0 : i32, i32
  }
  func.func @transform_4(%arg0: i32) -> (i32, i32) {
    %c0_i32 = arith.constant 0 : i32
    %c0_i32_0 = arith.constant 0 : i32
    %c0_i32_1 = arith.constant 0 : i32
    return %c0_i32, %c0_i32_0 : i32, i32
  }
  func.func @transform_5(%arg0: i32) -> (i32, i32) {
    %c0_i32 = arith.constant 0 : i32
    %c0_i32_0 = arith.constant 0 : i32
    %c0_i32_1 = arith.constant 0 : i32
    return %c0_i32, %c0_i32_0 : i32, i32
  }
  func.func @transform_6(%arg0: i32) -> (i32, i32) {
    %c0_i32 = arith.constant 0 : i32
    %c0_i32_0 = arith.constant 0 : i32
    %c0_i32_1 = arith.constant 0 : i32
    return %c0_i32, %c0_i32_0 : i32, i32
  }
  func.func @transform_7(%arg0: i32) -> (i32, i32) {
    %c0_i32 = arith.constant 0 : i32
    %c0_i32_0 = arith.constant 0 : i32
    %c0_i32_1 = arith.constant 0 : i32
    return %c0_i32, %c0_i32_0 : i32, i32
  }
  func.func @transform_8(%arg0: i32) -> (i32, i32) {
    %c0_i32 = arith.constant 0 : i32
    %c0_i32_0 = arith.constant 0 : i32
    %c0_i32_1 = arith.constant 0 : i32
    return %c0_i32, %c0_i32_0 : i32, i32
  }
  func.func @transform_9(%arg0: i32) -> (i32, i32) {
    %c0_i32 = arith.constant 0 : i32
    %c0_i32_0 = arith.constant 0 : i32
    return %c0_i32, %arg0 : i32, i32
  }
}

</mosaic_0001>

<llo_original>
// kernel: mlp_forward.1
$region0: #{mlp_forward.1}
  #allocation0 [shape = 'u32[]', space=smem, size = 0x4, offset = 0x4, fixed_abs, tag = 'smem constant byte address 0x4 - core index']
  #allocation1 [shape = 'u32[144,128]{1,0:T(1,128)}', space=vmem, size = 0x12000, scoped, tag = 'internal scratch']
  #allocation2 [shape = 'f32[1,1]{1,0:T(1,128)S(1)}', space=vmem, size = 0x200, scoped, tag = 'scoped memory for mlp_forward.1']
  %s0 = inlined_call_operand.vmem [shape: f32[8,128], index: 0, kind: input, shape index: {}]
  %s1 = inlined_call_operand.hbm [shape: f32[128,128], index: 1, kind: input, shape index: {}]
  %s2 = inlined_call_operand.vmem [shape: f32[1,128], index: 2, kind: input, shape index: {}]
  %s3 = inlined_call_operand.hbm [shape: f32[128,128], index: 3, kind: input, shape index: {}]
  %s4 = inlined_call_operand.vmem [shape: f32[1,128], index: 4, kind: input, shape index: {}]
  %s5 = inlined_call_operand.hbm [shape: f32[128,128], index: 5, kind: input, shape index: {}]
  %s6 = inlined_call_operand.vmem [shape: f32[1,128], index: 6, kind: input, shape index: {}]
  %s7 = inlined_call_operand.vmem [shape: f32[1,128], index: 7, kind: input, shape index: {}]
  %s8 = inlined_call_operand.<no memory space> [shape: f32[1,1], index: 8, kind: input, shape index: {}]
  %s9 = inlined_call_operand.hbm [shape: f32[1,8], index: 9, kind: output, shape index: {}]
  %s10 = sld [smem:[#allocation0]]
  $region58: #{mlp_forward.1} parent=0
    _
  %s12 = ssub.s32 1, %s10
  %s13 = scalar_select 0, %s12, %s10
  %v14 = vstv %s8
  %15 = vst [vmem:[#allocation2] sm:$0x1] %v14
  $region1: #{mlp_forward.1} parent=0
    #allocation3 [shape = 'u8[65536]{0}', space=vmem, size = 0x10000, scoped, tag = 'input window, operand 1, single buffered']
    #allocation4 [shape = 's32[1]{0}', space=sflag, size = 0x4, scoped, tag = 'scoped memory for mlp_forward.1']
    #allocation5 [shape = 's32[1]{0}', space=sflag, size = 0x4, scoped, tag = 'scoped memory for mlp_forward.1']
    #allocation6 [shape = 'u8[65536]{0}', space=vmem, size = 0x10000, scoped, tag = 'input window, operand 3, single buffered']
    #allocation7 [shape = 's32[1]{0}', space=sflag, size = 0x4, scoped, tag = 'scoped memory for mlp_forward.1']
    #allocation8 [shape = 'u8[65536]{0}', space=vmem, size = 0x10000, scoped, tag = 'input window, operand 5, single buffered']
    #allocation9 [shape = 'u8[512]{0}', space=vmem, size = 0x400, scoped, tag = 'output window, operand 0, single buffered']
    %16 = vsyncpa [#allocation4], 0
    %17 = vsyncpa [#allocation7], 0
    %18 = vsyncpa [#allocation5], 0
    // Predicated region
    $region2: #{mlp_forward.1} parent=1 // pred_check
      _
    $region3: #{mlp_forward.1} parent=1 // pred_check_branch
      %20 = sbr.rel (0) target = $region5
    $region4: #{mlp_forward.1} parent=1 // pred_region
      _
    $region5: #{mlp_forward.1} parent=1 // pred_fallthru
      _
    // Predicated region
    $region6: #{mlp_forward.1} parent=1 // pred_check
      _
    $region7: #{mlp_forward.1} parent=1 // pred_check_branch
      %22 = sbr.rel (0) target = $region9
    $region8: #{mlp_forward.1} parent=1 // pred_region
      %s24 = ssub.s32 2048, 2048
      %25 = vsyncadd [#allocation4], %s24
      %s26 = sshll.u32 [#allocation3], 4
      %s27 = int_to_ptr.vmem [resolvable:$true] %s26
      %32 = dma.hbm_to_vmem [thread:$0]  %s1, 2048, %s27, [#allocation4], 128, 128, 8
    $region9: #{mlp_forward.1} parent=1 // pred_fallthru
      _
    // Predicated region
    $region10: #{mlp_forward.1} parent=1 // pred_check
      _
    $region11: #{mlp_forward.1} parent=1 // pred_check_branch
      %34 = sbr.rel (0) target = $region13
    $region12: #{mlp_forward.1} parent=1 // pred_region
      _
    $region13: #{mlp_forward.1} parent=1 // pred_fallthru
      _
    // Predicated region
    $region14: #{mlp_forward.1} parent=1 // pred_check
      _
    $region15: #{mlp_forward.1} parent=1 // pred_check_branch
      %36 = sbr.rel (0) target = $region17
    $region16: #{mlp_forward.1} parent=1 // pred_region
      %s38 = ssub.s32 2048, 2048
      %39 = vsyncadd [#allocation7], %s38
      %s40 = sshll.u32 [#allocation6], 4
      %s41 = int_to_ptr.vmem [resolvable:$true] %s40
      %46 = dma.hbm_to_vmem [thread:$0]  %s3, 2048, %s41, [#allocation7], 128, 128, 8
    $region17: #{mlp_forward.1} parent=1 // pred_fallthru
      _
    // Predicated region
    $region18: #{mlp_forward.1} parent=1 // pred_check
      _
    $region19: #{mlp_forward.1} parent=1 // pred_check_branch
      %48 = sbr.rel (0) target = $region21
    $region20: #{mlp_forward.1} parent=1 // pred_region
      _
    $region21: #{mlp_forward.1} parent=1 // pred_fallthru
      _
    // Predicated region
    $region22: #{mlp_forward.1} parent=1 // pred_check
      _
    $region23: #{mlp_forward.1} parent=1 // pred_check_branch
      %50 = sbr.rel (0) target = $region25
    $region24: #{mlp_forward.1} parent=1 // pred_region
      %s52 = ssub.s32 2048, 2048
      %53 = vsyncadd [#allocation7], %s52
      %s54 = sshll.u32 [#allocation8], 4
      %s55 = int_to_ptr.vmem [resolvable:$true] %s54
      %60 = dma.hbm_to_vmem [thread:$0]  %s5, 2048, %s55, [#allocation7], 128, 128, 8
    $region25: #{mlp_forward.1} parent=1 // pred_fallthru
      _
    // Predicated region
    $region26: #{mlp_forward.1} parent=1 // pred_check
      _
    $region27: #{mlp_forward.1} parent=1 // pred_check_branch
      %62 = sbr.rel (0) target = $region29
    $region28: #{mlp_forward.1} parent=1 // pred_region
      _
    $region29: #{mlp_forward.1} parent=1 // pred_fallthru
      _
    // Predicated region
    $region30: #{mlp_forward.1} parent=1 // pred_check
      _
    $region31: #{mlp_forward.1} parent=1 // pred_check_branch
      %64 = sbr.rel (0) target = $region33
    $region32: #{mlp_forward.1} parent=1 // pred_region
      _
    $region33: #{mlp_forward.1} parent=1 // pred_fallthru
      _
    // Predicated region
    $region34: #{mlp_forward.1} parent=1 // pred_check
      _
    $region35: #{mlp_forward.1} parent=1 // pred_check_branch
      %66 = sbr.rel (0) target = $region37
    $region36: #{mlp_forward.1} parent=1 // pred_region
      _
    $region37: #{mlp_forward.1} parent=1 // pred_fallthru
      _
    // Predicated region
    $region38: #{mlp_forward.1} parent=1 // pred_check
      _
    $region39: #{mlp_forward.1} parent=1 // pred_check_branch
      %68 = sbr.rel (0) target = $region41
    $region40: #{mlp_forward.1} parent=1 // pred_region
      %69 = dma.done [#allocation4], 2048
    $region41: #{mlp_forward.1} parent=1 // pred_fallthru
      _
    // Predicated region
    $region42: #{mlp_forward.1} parent=1 // pred_check
      _
    $region43: #{mlp_forward.1} parent=1 // pred_check_branch
      %71 = sbr.rel (0) target = $region45
    $region44: #{mlp_forward.1} parent=1 // pred_region
      %72 = dma.done [#allocation7], 2048
    $region45: #{mlp_forward.1} parent=1 // pred_fallthru
      _
    // Predicated region
    $region46: #{mlp_forward.1} parent=1 // pred_check
      _
    $region47: #{mlp_forward.1} parent=1 // pred_check_branch
      %74 = sbr.rel (0) target = $region49
    $region48: #{mlp_forward.1} parent=1 // pred_region
      %75 = dma.done [#allocation7], 2048
    $region49: #{mlp_forward.1} parent=1 // pred_fallthru
      _
    %v76 = vld [vmem:[%s0] sm:$0xff]
    %v77 = vld [vmem:[#allocation3] sm:$0xff]
    %v78 = vld [vmem:[#allocation3 + $0x8] sm:$0xff]
    %v79 = vld [vmem:[#allocation3 + $0x10] sm:$0xff]
    %v80 = vld [vmem:[#allocation3 + $0x18] sm:$0xff]
    %v81 = vld [vmem:[#allocation3 + $0x20] sm:$0xff]
    %v82 = vld [vmem:[#allocation3 + $0x28] sm:$0xff]
    %v83 = vld [vmem:[#allocation3 + $0x30] sm:$0xff]
    %v84 = vld [vmem:[#allocation3 + $0x38] sm:$0xff]
    %v85 = vld [vmem:[#allocation3 + $0x40] sm:$0xff]
    %v86 = vld [vmem:[#allocation3 + $0x48] sm:$0xff]
    %v87 = vld [vmem:[#allocation3 + $0x50] sm:$0xff]
    %v88 = vld [vmem:[#allocation3 + $0x58] sm:$0xff]
    %v89 = vld [vmem:[#allocation3 + $0x60] sm:$0xff]
    %v90 = vld [vmem:[#allocation3 + $0x68] sm:$0xff]
    %v91 = vld [vmem:[#allocation3 + $0x70] sm:$0xff]
    %v92 = vld [vmem:[#allocation3 + $0x78] sm:$0xff]
    %v93 = vld [vmem:[%s2] sm:$0x1]
    %v95 = vlaneseq
    %v96 = vshrl.u32 %v95, 7
    %v97 = vsub.s32 0, %v96
    %v98 = vrot.slane %v93, %v97
    %100 = vmatprep.subr.mxu0 0.0
    %101 = vmatpush1.msra.mxu0 %v77
    %102 = vmatprep.subr.mxu0 0.0
    %103 = vmatpush1.msra.mxu0 %v78
    %104 = vmatprep.subr.mxu0 0.0
    %105 = vmatpush1.msra.mxu0 %v79
    %106 = vmatprep.subr.mxu0 0.0
    %107 = vmatpush1.msra.mxu0 %v80
    %108 = vmatprep.subr.mxu0 0.0
    %109 = vmatpush1.msra.mxu0 %v81
    %110 = vmatprep.subr.mxu0 0.0
    %111 = vmatpush1.msra.mxu0 %v82
    %112 = vmatprep.subr.mxu0 0.0
    %113 = vmatpush1.msra.mxu0 %v83
    %114 = vmatprep.subr.mxu0 0.0
    %115 = vmatpush1.msra.mxu0 %v84
    %116 = vmatprep.subr.mxu0 0.0
    %117 = vmatpush1.msra.mxu0 %v85
    %118 = vmatprep.subr.mxu0 0.0
    %119 = vmatpush1.msra.mxu0 %v86
    %120 = vmatprep.subr.mxu0 0.0
    %121 = vmatpush1.msra.mxu0 %v87
    %122 = vmatprep.subr.mxu0 0.0
    %123 = vmatpush1.msra.mxu0 %v88
    %124 = vmatprep.subr.mxu0 0.0
    %125 = vmatpush1.msra.mxu0 %v89
    %126 = vmatprep.subr.mxu0 0.0
    %127 = vmatpush1.msra.mxu0 %v90
    %128 = vmatprep.subr.mxu0 0.0
    %129 = vmatpush1.msra.mxu0 %v91
    %130 = vmatprep.subr.mxu0 0.0
    %131 = vmatpush1.msra.mxu0 %v92
    %132 = vmatprep.subr.mxu0 0.0
    %133 = vmatpush1.msra.mxu0 0.0
    %134 = vmatprep.subr.mxu0 0.0
    %135 = vmatpush1.msra.mxu0 0.0
    %136 = vmatprep.subr.mxu0 0.0
    %137 = vmatpush1.msra.mxu0 0.0
    %138 = vmatprep.subr.mxu0 0.0
    %139 = vmatpush1.msra.mxu0 0.0
    %140 = vmatprep.subr.mxu0 0.0
    %141 = vmatpush1.msra.mxu0 0.0
    %142 = vmatprep.subr.mxu0 0.0
    %143 = vmatpush1.msra.mxu0 0.0
    %144 = vmatprep.subr.mxu0 0.0
    %145 = vmatpush1.msra.mxu0 0.0
    %146 = vmatprep.subr.mxu0 0.0
    %147 = vmatpush1.msra.mxu0 0.0
    %148 = vmatprep.subr.mxu0 0.0
    %149 = vmatpush1.msra.mxu0 0.0
    %150 = vmatprep.subr.mxu0 0.0
    %151 = vmatpush1.msra.mxu0 0.0
    %152 = vmatprep.subr.mxu0 0.0
    %153 = vmatpush1.msra.mxu0 0.0
    %154 = vmatprep.subr.mxu0 0.0
    %155 = vmatpush1.msra.mxu0 0.0
    %156 = vmatprep.subr.mxu0 0.0
    %157 = vmatpush1.msra.mxu0 0.0
    %158 = vmatprep.subr.mxu0 0.0
    %159 = vmatpush1.msra.mxu0 0.0
    %160 = vmatprep.subr.mxu0 0.0
    %161 = vmatpush1.msra.mxu0 0.0
    %162 = vmatprep.subr.mxu0 0.0
    %163 = vmatpush1.msra.mxu0 0.0
    %164 = vmatprep.mubr.f32.mxu0 0.0
    %165 = vmatmul.mubr.f32.gmra.mrb[0].mxu0 %v76
    %v166 = vpop.f32.mrb[0].mxu0
    %v167 = vadd.f32 %v98, %v166
    %v168 = vpop.f32.mrb[0].mxu0
    %169 = vdwg.mxu0
    %v170 = vmax.f32 %v167, 0.0
    %v171 = vld [vmem:[#allocation6] sm:$0xff]
    %v172 = vld [vmem:[#allocation6 + $0x8] sm:$0xff]
    %v173 = vld [vmem:[#allocation6 + $0x10] sm:$0xff]
    %v174 = vld [vmem:[#allocation6 + $0x18] sm:$0xff]
    %v175 = vld [vmem:[#allocation6 + $0x20] sm:$0xff]
    %v176 = vld [vmem:[#allocation6 + $0x28] sm:$0xff]
    %v177 = vld [vmem:[#allocation6 + $0x30] sm:$0xff]
    %v178 = vld [vmem:[#allocation6 + $0x38] sm:$0xff]
    %v179 = vld [vmem:[#allocation6 + $0x40] sm:$0xff]
    %v180 = vld [vmem:[#allocation6 + $0x48] sm:$0xff]
    %v181 = vld [vmem:[#allocation6 + $0x50] sm:$0xff]
    %v182 = vld [vmem:[#allocation6 + $0x58] sm:$0xff]
    %v183 = vld [vmem:[#allocation6 + $0x60] sm:$0xff]
    %v184 = vld [vmem:[#allocation6 + $0x68] sm:$0xff]
    %v185 = vld [vmem:[#allocation6 + $0x70] sm:$0xff]
    %v186 = vld [vmem:[#allocation6 + $0x78] sm:$0xff]
    %v187 = vld [vmem:[%s4] sm:$0x1]
    %v189 = vlaneseq
    %v190 = vshrl.u32 %v189, 7
    %v191 = vsub.s32 0, %v190
    %v192 = vrot.slane %v187, %v191
    %194 = vmatprep.subr.mxu0 0.0
    %195 = vmatpush1.msra.mxu0 %v171
    %196 = vmatprep.subr.mxu0 0.0
    %197 = vmatpush1.msra.mxu0 %v172
    %198 = vmatprep.subr.mxu0 0.0
    %199 = vmatpush1.msra.mxu0 %v173
    %200 = vmatprep.subr.mxu0 0.0
    %201 = vmatpush1.msra.mxu0 %v174
    %202 = vmatprep.subr.mxu0 0.0
    %203 = vmatpush1.msra.mxu0 %v175
    %204 = vmatprep.subr.mxu0 0.0
    %205 = vmatpush1.msra.mxu0 %v176
    %206 = vmatprep.subr.mxu0 0.0
    %207 = vmatpush1.msra.mxu0 %v177
    %208 = vmatprep.subr.mxu0 0.0
    %209 = vmatpush1.msra.mxu0 %v178
    %210 = vmatprep.subr.mxu0 0.0
    %211 = vmatpush1.msra.mxu0 %v179
    %212 = vmatprep.subr.mxu0 0.0
    %213 = vmatpush1.msra.mxu0 %v180
    %214 = vmatprep.subr.mxu0 0.0
    %215 = vmatpush1.msra.mxu0 %v181
    %216 = vmatprep.subr.mxu0 0.0
    %217 = vmatpush1.msra.mxu0 %v182
    %218 = vmatprep.subr.mxu0 0.0
    %219 = vmatpush1.msra.mxu0 %v183
    %220 = vmatprep.subr.mxu0 0.0
    %221 = vmatpush1.msra.mxu0 %v184
    %222 = vmatprep.subr.mxu0 0.0
    %223 = vmatpush1.msra.mxu0 %v185
    %224 = vmatprep.subr.mxu0 0.0
    %225 = vmatpush1.msra.mxu0 %v186
    %226 = vmatprep.subr.mxu0 0.0
    %227 = vmatpush1.msra.mxu0 0.0
    %228 = vmatprep.subr.mxu0 0.0
    %229 = vmatpush1.msra.mxu0 0.0
    %230 = vmatprep.subr.mxu0 0.0
    %231 = vmatpush1.msra.mxu0 0.0
    %232 = vmatprep.subr.mxu0 0.0
    %233 = vmatpush1.msra.mxu0 0.0
    %234 = vmatprep.subr.mxu0 0.0
    %235 = vmatpush1.msra.mxu0 0.0
    %236 = vmatprep.subr.mxu0 0.0
    %237 = vmatpush1.msra.mxu0 0.0
    %238 = vmatprep.subr.mxu0 0.0
    %239 = vmatpush1.msra.mxu0 0.0
    %240 = vmatprep.subr.mxu0 0.0
    %241 = vmatpush1.msra.mxu0 0.0
    %242 = vmatprep.subr.mxu0 0.0
    %243 = vmatpush1.msra.mxu0 0.0
    %244 = vmatprep.subr.mxu0 0.0
    %245 = vmatpush1.msra.mxu0 0.0
    %246 = vmatprep.subr.mxu0 0.0
    %247 = vmatpush1.msra.mxu0 0.0
    %248 = vmatprep.subr.mxu0 0.0
    %249 = vmatpush1.msra.mxu0 0.0
    %250 = vmatprep.subr.mxu0 0.0
    %251 = vmatpush1.msra.mxu0 0.0
    %252 = vmatprep.subr.mxu0 0.0
    %253 = vmatpush1.msra.mxu0 0.0
    %254 = vmatprep.subr.mxu0 0.0
    %255 = vmatpush1.msra.mxu0 0.0
    %256 = vmatprep.subr.mxu0 0.0
    %257 = vmatpush1.msra.mxu0 0.0
    %258 = vmatprep.mubr.f32.mxu0 0.0
    %259 = vmatmul.mubr.f32.gmra.mrb[0].mxu0 %v170
    %v260 = vpop.f32.mrb[0].mxu0
    %v261 = vadd.f32 %v192, %v260
    %v262 = vpop.f32.mrb[0].mxu0
    %263 = vdwg.mxu0
    %v264 = vmax.f32 %v261, 0.0
    %v265 = vld [vmem:[#allocation8] sm:$0xff]
    %v266 = vld [vmem:[#allocation8 + $0x8] sm:$0xff]
    %v267 = vld [vmem:[#allocation8 + $0x10] sm:$0xff]
    %v268 = vld [vmem:[#allocation8 + $0x18] sm:$0xff]
    %v269 = vld [vmem:[#allocation8 + $0x20] sm:$0xff]
    %v270 = vld [vmem:[#allocation8 + $0x28] sm:$0xff]
    %v271 = vld [vmem:[#allocation8 + $0x30] sm:$0xff]
    %v272 = vld [vmem:[#allocation8 + $0x38] sm:$0xff]
    %v273 = vld [vmem:[#allocation8 + $0x40] sm:$0xff]
    %v274 = vld [vmem:[#allocation8 + $0x48] sm:$0xff]
    %v275 = vld [vmem:[#allocation8 + $0x50] sm:$0xff]
    %v276 = vld [vmem:[#allocation8 + $0x58] sm:$0xff]
    %v277 = vld [vmem:[#allocation8 + $0x60] sm:$0xff]
    %v278 = vld [vmem:[#allocation8 + $0x68] sm:$0xff]
    %v279 = vld [vmem:[#allocation8 + $0x70] sm:$0xff]
    %v280 = vld [vmem:[#allocation8 + $0x78] sm:$0xff]
    %v281 = vld [vmem:[%s6] sm:$0x1]
    %v283 = vlaneseq
    %v284 = vshrl.u32 %v283, 7
    %v285 = vsub.s32 0, %v284
    %v286 = vrot.slane %v281, %v285
    %288 = vmatprep.subr.mxu0 0.0
    %289 = vmatpush1.msra.mxu0 %v265
    %290 = vmatprep.subr.mxu0 0.0
    %291 = vmatpush1.msra.mxu0 %v266
    %292 = vmatprep.subr.mxu0 0.0
    %293 = vmatpush1.msra.mxu0 %v267
    %294 = vmatprep.subr.mxu0 0.0
    %295 = vmatpush1.msra.mxu0 %v268
    %296 = vmatprep.subr.mxu0 0.0
    %297 = vmatpush1.msra.mxu0 %v269
    %298 = vmatprep.subr.mxu0 0.0
    %299 = vmatpush1.msra.mxu0 %v270
    %300 = vmatprep.subr.mxu0 0.0
    %301 = vmatpush1.msra.mxu0 %v271
    %302 = vmatprep.subr.mxu0 0.0
    %303 = vmatpush1.msra.mxu0 %v272
    %304 = vmatprep.subr.mxu0 0.0
    %305 = vmatpush1.msra.mxu0 %v273
    %306 = vmatprep.subr.mxu0 0.0
    %307 = vmatpush1.msra.mxu0 %v274
    %308 = vmatprep.subr.mxu0 0.0
    %309 = vmatpush1.msra.mxu0 %v275
    %310 = vmatprep.subr.mxu0 0.0
    %311 = vmatpush1.msra.mxu0 %v276
    %312 = vmatprep.subr.mxu0 0.0
    %313 = vmatpush1.msra.mxu0 %v277
    %314 = vmatprep.subr.mxu0 0.0
    %315 = vmatpush1.msra.mxu0 %v278
    %316 = vmatprep.subr.mxu0 0.0
    %317 = vmatpush1.msra.mxu0 %v279
    %318 = vmatprep.subr.mxu0 0.0
    %319 = vmatpush1.msra.mxu0 %v280
    %320 = vmatprep.subr.mxu0 0.0
    %321 = vmatpush1.msra.mxu0 0.0
    %322 = vmatprep.subr.mxu0 0.0
    %323 = vmatpush1.msra.mxu0 0.0
    %324 = vmatprep.subr.mxu0 0.0
    %325 = vmatpush1.msra.mxu0 0.0
    %326 = vmatprep.subr.mxu0 0.0
    %327 = vmatpush1.msra.mxu0 0.0
    %328 = vmatprep.subr.mxu0 0.0
    %329 = vmatpush1.msra.mxu0 0.0
    %330 = vmatprep.subr.mxu0 0.0
    %331 = vmatpush1.msra.mxu0 0.0
    %332 = vmatprep.subr.mxu0 0.0
    %333 = vmatpush1.msra.mxu0 0.0
    %334 = vmatprep.subr.mxu0 0.0
    %335 = vmatpush1.msra.mxu0 0.0
    %336 = vmatprep.subr.mxu0 0.0
    %337 = vmatpush1.msra.mxu0 0.0
    %338 = vmatprep.subr.mxu0 0.0
    %339 = vmatpush1.msra.mxu0 0.0
    %340 = vmatprep.subr.mxu0 0.0
    %341 = vmatpush1.msra.mxu0 0.0
    %342 = vmatprep.subr.mxu0 0.0
    %343 = vmatpush1.msra.mxu0 0.0
    %344 = vmatprep.subr.mxu0 0.0
    %345 = vmatpush1.msra.mxu0 0.0
    %346 = vmatprep.subr.mxu0 0.0
    %347 = vmatpush1.msra.mxu0 0.0
    %348 = vmatprep.subr.mxu0 0.0
    %349 = vmatpush1.msra.mxu0 0.0
    %350 = vmatprep.subr.mxu0 0.0
    %351 = vmatpush1.msra.mxu0 0.0
    %352 = vmatprep.mubr.f32.mxu0 0.0
    %353 = vmatmul.mubr.f32.gmra.mrb[0].mxu0 %v264
    %v354 = vpop.f32.mrb[0].mxu0
    %v355 = vadd.f32 %v286, %v354
    %v356 = vpop.f32.mrb[0].mxu0
    %357 = vdwg.mxu0
    %v358 = vmax.f32 %v355, 0.0
    %v359 = vld [vmem:[%s7] sm:$0x1]
    %v360 = vld [vmem:[#allocation2] sm:$0x1]
    %362 = vset.pattern.permute.xlu0 0
    %363 = vperm.xlu0 %362, %v360
    %v364 = vpop.permute.xlu0 %363
    %v366 = vlaneseq
    %v367 = vshrl.u32 %v366, 7
    %v368 = vsub.s32 0, %v367
    %v369 = vrot.slane %v364, %v368
    %370 = vmatprep.subr.mxu0 0.0
    %371 = vmatpush1.xpose.msra.mxu0 %v358
    %372 = vmatprep.subr.mxu0 0.0
    %373 = vmatpush1.xpose.msra.mxu0 0.0
    %374 = vmatprep.subr.mxu0 0.0
    %375 = vmatpush1.xpose.msra.mxu0 0.0
    %376 = vmatprep.subr.mxu0 0.0
    %377 = vmatpush1.xpose.msra.mxu0 0.0
    %378 = vmatprep.subr.mxu0 0.0
    %379 = vmatpush1.xpose.msra.mxu0 0.0
    %380 = vmatprep.subr.mxu0 0.0
    %381 = vmatpush1.xpose.msra.mxu0 0.0
    %382 = vmatprep.subr.mxu0 0.0
    %383 = vmatpush1.xpose.msra.mxu0 0.0
    %384 = vmatprep.subr.mxu0 0.0
    %385 = vmatpush1.xpose.msra.mxu0 0.0
    %386 = vmatprep.subr.mxu0 0.0
    %387 = vmatpush1.xpose.msra.mxu0 0.0
    %388 = vmatprep.subr.mxu0 0.0
    %389 = vmatpush1.xpose.msra.mxu0 0.0
    %390 = vmatprep.subr.mxu0 0.0
    %391 = vmatpush1.xpose.msra.mxu0 0.0
    %392 = vmatprep.subr.mxu0 0.0
    %393 = vmatpush1.xpose.msra.mxu0 0.0
    %394 = vmatprep.subr.mxu0 0.0
    %395 = vmatpush1.xpose.msra.mxu0 0.0
    %396 = vmatprep.subr.mxu0 0.0
    %397 = vmatpush1.xpose.msra.mxu0 0.0
    %398 = vmatprep.subr.mxu0 0.0
    %399 = vmatpush1.xpose.msra.mxu0 0.0
    %400 = vmatprep.subr.mxu0 0.0
    %401 = vmatpush1.xpose.msra.mxu0 0.0
    %402 = vmatprep.subr.mxu0 0.0
    %403 = vmatpush1.xpose.msra.mxu0 0.0
    %404 = vmatprep.subr.mxu0 0.0
    %405 = vmatpush1.xpose.msra.mxu0 0.0
    %406 = vmatprep.subr.mxu0 0.0
    %407 = vmatpush1.xpose.msra.mxu0 0.0
    %408 = vmatprep.subr.mxu0 0.0
    %409 = vmatpush1.xpose.msra.mxu0 0.0
    %410 = vmatprep.subr.mxu0 0.0
    %411 = vmatpush1.xpose.msra.mxu0 0.0
    %412 = vmatprep.subr.mxu0 0.0
    %413 = vmatpush1.xpose.msra.mxu0 0.0
    %414 = vmatprep.subr.mxu0 0.0
    %415 = vmatpush1.xpose.msra.mxu0 0.0
    %416 = vmatprep.subr.mxu0 0.0
    %417 = vmatpush1.xpose.msra.mxu0 0.0
    %418 = vmatprep.subr.mxu0 0.0
    %419 = vmatpush1.xpose.msra.mxu0 0.0
    %420 = vmatprep.subr.mxu0 0.0
    %421 = vmatpush1.xpose.msra.mxu0 0.0
    %422 = vmatprep.subr.mxu0 0.0
    %423 = vmatpush1.xpose.msra.mxu0 0.0
    %424 = vmatprep.subr.mxu0 0.0
    %425 = vmatpush1.xpose.msra.mxu0 0.0
    %426 = vmatprep.subr.mxu0 0.0
    %427 = vmatpush1.xpose.msra.mxu0 0.0
    %428 = vmatprep.subr.mxu0 0.0
    %429 = vmatpush1.xpose.msra.mxu0 0.0
    %430 = vmatprep.subr.mxu0 0.0
    %431 = vmatpush1.xpose.msra.mxu0 0.0
    %432 = vmatprep.subr.mxu0 0.0
    %433 = vmatpush1.xpose.msra.mxu0 0.0
    %434 = vmatprep.mubr.f32.mxu0 0.0
    %435 = vmatmul.mubr.f32.gmra.mrb[0].mxu0 %v359
    %v436 = vpop.f32.mrb[0].mxu0
    %v437 = vadd.f32 %v369, %v436
    %v438 = vpop.f32.mrb[0].mxu0
    %439 = vdwg.mxu0
    %vm440 = vcmask 57344
    %441 = vst.msk [vmem:[#allocation9] sm:$0x1] %vm440, %v437
    // Predicated region
    $region50: #{mlp_forward.1} parent=1 // pred_check
      _
    $region51: #{mlp_forward.1} parent=1 // pred_check_branch
      %443 = sbr.rel (0) target = $region53
    $region52: #{mlp_forward.1} parent=1 // pred_region
      %s445 = ssub.s32 16, 16
      %446 = vsyncadd [#allocation5], %s445
      %s448 = sshll.u32 [#allocation9], 4
      %s449 = int_to_ptr.vmem [resolvable:$true] %s448
      %451 = dma.vmem_to_hbm [thread:$0]  %s449, 16, %s9, [#allocation5]
    $region53: #{mlp_forward.1} parent=1 // pred_fallthru
      _
    // Predicated region
    $region54: #{mlp_forward.1} parent=1 // pred_check
      _
    $region55: #{mlp_forward.1} parent=1 // pred_check_branch
      %453 = sbr.rel (0) target = $region57
    $region56: #{mlp_forward.1} parent=1 // pred_region
      %454 = dma.done [#allocation5], 16
    $region57: #{mlp_forward.1} parent=1 // pred_fallthru
      _
    %455 = vsyncpa [#allocation4], 1
    %456 = vsyncpa [#allocation7], 1
    %457 = vsyncpa [#allocation5], 1

// kernel: mlp_forward.1
$region0: #{mlp_forward.1}
  #allocation0 [shape = 'u32[]', space=smem, size = 0x4, offset = 0x4, fixed_abs, tag = 'smem constant byte address 0x4 - core index']
  #allocation1 [shape = 'u32[144,128]{1,0:T(1,128)}', space=vmem, size = 0x12000, scoped, tag = 'internal scratch']
  #allocation2 [shape = 'f32[1,1]{1,0:T(1,128)S(1)}', space=vmem, size = 0x200, scoped, tag = 'scoped memory for mlp_forward.1']
  %s0 = inlined_call_operand.vmem [shape: f32[8,128], index: 0, kind: input, shape index: {}]
  %s1 = inlined_call_operand.hbm [shape: f32[128,128], index: 1, kind: input, shape index: {}]
  %s2 = inlined_call_operand.vmem [shape: f32[1,128], index: 2, kind: input, shape index: {}]
  %s3 = inlined_call_operand.hbm [shape: f32[128,128], index: 3, kind: input, shape index: {}]
  %s4 = inlined_call_operand.vmem [shape: f32[1,128], index: 4, kind: input, shape index: {}]
  %s5 = inlined_call_operand.hbm [shape: f32[128,128], index: 5, kind: input, shape index: {}]
  %s6 = inlined_call_operand.vmem [shape: f32[1,128], index: 6, kind: input, shape index: {}]
  %s7 = inlined_call_operand.vmem [shape: f32[1,128], index: 7, kind: input, shape index: {}]
  %s8 = inlined_call_operand.<no memory space> [shape: f32[1,1], index: 8, kind: input, shape index: {}]
  %s9 = inlined_call_operand.hbm [shape: f32[1,8], index: 9, kind: output, shape index: {}]
  %s10 = sld [smem:[#allocation0]]
  $region58: #{mlp_forward.1} parent=0
    _
  %s12 = ssub.s32 1, %s10
  %s13 = scalar_select 0, %s12, %s10
  %v14 = vstv %s8
  %15 = vst [vmem:[#allocation2] sm:$0x1] %v14
  $region1: #{mlp_forward.1} parent=0
    #allocation3 [shape = 'u8[65536]{0}', space=vmem, size = 0x10000, scoped, tag = 'input window, operand 1, single buffered']
    #allocation4 [shape = 's32[1]{0}', space=sflag, size = 0x4, scoped, tag = 'scoped memory for mlp_forward.1']
    #allocation5 [shape = 's32[1]{0}', space=sflag, size = 0x4, scoped, tag = 'scoped memory for mlp_forward.1']
    #allocation6 [shape = 'u8[65536]{0}', space=vmem, size = 0x10000, scoped, tag = 'input window, operand 3, single buffered']
    #allocation7 [shape = 's32[1]{0}', space=sflag, size = 0x4, scoped, tag = 'scoped memory for mlp_forward.1']
    #allocation8 [shape = 'u8[65536]{0}', space=vmem, size = 0x10000, scoped, tag = 'input window, operand 5, single buffered']
    #allocation9 [shape = 'u8[512]{0}', space=vmem, size = 0x400, scoped, tag = 'output window, operand 0, single buffered']
    %16 = vsyncpa [#allocation4], 0
    %17 = vsyncpa [#allocation7], 0
    %18 = vsyncpa [#allocation5], 0
    // Predicated region
    $region2: #{mlp_forward.1} parent=1 // pred_check
      _
    $region3: #{mlp_forward.1} parent=1 // pred_check_branch
      %20 = sbr.rel (0) target = $region5
    $region4: #{mlp_forward.1} parent=1 // pred_region
      _
    $region5: #{mlp_forward.1} parent=1 // pred_fallthru
      _
    // Predicated region
    $region6: #{mlp_forward.1} parent=1 // pred_check
      _
    $region7: #{mlp_forward.1} parent=1 // pred_check_branch
      %22 = sbr.rel (0) target = $region9
    $region8: #{mlp_forward.1} parent=1 // pred_region
      %s24 = ssub.s32 2048, 2048
      %25 = vsyncadd [#allocation4], %s24
      %s26 = sshll.u32 [#allocation3], 4
      %s27 = int_to_ptr.vmem [resolvable:$true] %s26
      %32 = dma.hbm_to_vmem [thread:$0]  %s1, 2048, %s27, [#allocation4], 128, 128, 8
    $region9: #{mlp_forward.1} parent=1 // pred_fallthru
      _
    // Predicated region
    $region10: #{mlp_forward.1} parent=1 // pred_check
      _
    $region11: #{mlp_forward.1} parent=1 // pred_check_branch
      %34 = sbr.rel (0) target = $region13
    $region12: #{mlp_forward.1} parent=1 // pred_region
      _
    $region13: #{mlp_forward.1} parent=1 // pred_fallthru
      _
    // Predicated region
    $region14: #{mlp_forward.1} parent=1 // pred_check
      _
    $region15: #{mlp_forward.1} parent=1 // pred_check_branch
      %36 = sbr.rel (0) target = $region17
    $region16: #{mlp_forward.1} parent=1 // pred_region
      %s38 = ssub.s32 2048, 2048
      %39 = vsyncadd [#allocation7], %s38
      %s40 = sshll.u32 [#allocation6], 4
      %s41 = int_to_ptr.vmem [resolvable:$true] %s40
      %46 = dma.hbm_to_vmem [thread:$0]  %s3, 2048, %s41, [#allocation7], 128, 128, 8
    $region17: #{mlp_forward.1} parent=1 // pred_fallthru
      _
    // Predicated region
    $region18: #{mlp_forward.1} parent=1 // pred_check
      _
    $region19: #{mlp_forward.1} parent=1 // pred_check_branch
      %48 = sbr.rel (0) target = $region21
    $region20: #{mlp_forward.1} parent=1 // pred_region
      _
    $region21: #{mlp_forward.1} parent=1 // pred_fallthru
      _
    // Predicated region
    $region22: #{mlp_forward.1} parent=1 // pred_check
      _
    $region23: #{mlp_forward.1} parent=1 // pred_check_branch
      %50 = sbr.rel (0) target = $region25
    $region24: #{mlp_forward.1} parent=1 // pred_region
      %s52 = ssub.s32 2048, 2048
      %53 = vsyncadd [#allocation7], %s52
      %s54 = sshll.u32 [#allocation8], 4
      %s55 = int_to_ptr.vmem [resolvable:$true] %s54
      %60 = dma.hbm_to_vmem [thread:$0]  %s5, 2048, %s55, [#allocation7], 128, 128, 8
    $region25: #{mlp_forward.1} parent=1 // pred_fallthru
      _
    // Predicated region
    $region26: #{mlp_forward.1} parent=1 // pred_check
      _
    $region27: #{mlp_forward.1} parent=1 // pred_check_branch
      %62 = sbr.rel (0) target = $region29
    $region28: #{mlp_forward.1} parent=1 // pred_region
      _
    $region29: #{mlp_forward.1} parent=1 // pred_fallthru
      _
    // Predicated region
    $region30: #{mlp_forward.1} parent=1 // pred_check
      _
    $region31: #{mlp_forward.1} parent=1 // pred_check_branch
      %64 = sbr.rel (0) target = $region33
    $region32: #{mlp_forward.1} parent=1 // pred_region
      _
    $region33: #{mlp_forward.1} parent=1 // pred_fallthru
      _
    // Predicated region
    $region34: #{mlp_forward.1} parent=1 // pred_check
      _
    $region35: #{mlp_forward.1} parent=1 // pred_check_branch
      %66 = sbr.rel (0) target = $region37
    $region36: #{mlp_forward.1} parent=1 // pred_region
      _
    $region37: #{mlp_forward.1} parent=1 // pred_fallthru
      _
    // Predicated region
    $region38: #{mlp_forward.1} parent=1 // pred_check
      _
    $region39: #{mlp_forward.1} parent=1 // pred_check_branch
      %68 = sbr.rel (0) target = $region41
    $region40: #{mlp_forward.1} parent=1 // pred_region
      %69 = dma.done [#allocation4], 2048
    $region41: #{mlp_forward.1} parent=1 // pred_fallthru
      _
    // Predicated region
    $region42: #{mlp_forward.1} parent=1 // pred_check
      _
    $region43: #{mlp_forward.1} parent=1 // pred_check_branch
      %71 = sbr.rel (0) target = $region45
    $region44: #{mlp_forward.1} parent=1 // pred_region
      %72 = dma.done [#allocation7], 2048
    $region45: #{mlp_forward.1} parent=1 // pred_fallthru
      _
    // Predicated region
    $region46: #{mlp_forward.1} parent=1 // pred_check
      _
    $region47: #{mlp_forward.1} parent=1 // pred_check_branch
      %74 = sbr.rel (0) target = $region49
    $region48: #{mlp_forward.1} parent=1 // pred_region
      %75 = dma.done [#allocation7], 2048
    $region49: #{mlp_forward.1} parent=1 // pred_fallthru
      _
    %v76 = vld [vmem:[%s0] sm:$0xff]
    %v77 = vld [vmem:[#allocation3] sm:$0xff]
    %v78 = vld [vmem:[#allocation3 + $0x8] sm:$0xff]
    %v79 = vld [vmem:[#allocation3 + $0x10] sm:$0xff]
    %v80 = vld [vmem:[#allocation3 + $0x18] sm:$0xff]
    %v81 = vld [vmem:[#allocation3 + $0x20] sm:$0xff]
    %v82 = vld [vmem:[#allocation3 + $0x28] sm:$0xff]
    %v83 = vld [vmem:[#allocation3 + $0x30] sm:$0xff]
    %v84 = vld [vmem:[#allocation3 + $0x38] sm:$0xff]
    %v85 = vld [vmem:[#allocation3 + $0x40] sm:$0xff]
    %v86 = vld [vmem:[#allocation3 + $0x48] sm:$0xff]
    %v87 = vld [vmem:[#allocation3 + $0x50] sm:$0xff]
    %v88 = vld [vmem:[#allocation3 + $0x58] sm:$0xff]
    %v89 = vld [vmem:[#allocation3 + $0x60] sm:$0xff]
    %v90 = vld [vmem:[#allocation3 + $0x68] sm:$0xff]
    %v91 = vld [vmem:[#allocation3 + $0x70] sm:$0xff]
    %v92 = vld [vmem:[#allocation3 + $0x78] sm:$0xff]
    %v93 = vld [vmem:[%s2] sm:$0x1]
    %v95 = vlaneseq
    %v96 = vshrl.u32 %v95, 7
    %v97 = vsub.s32 0, %v96
    %v98 = vrot.slane %v93, %v97
    %100 = vmatprep.subr.mxu0 0.0
    %101 = vmatpush1.msra.mxu0 %v77
    %102 = vmatprep.subr.mxu0 0.0
    %103 = vmatpush1.msra.mxu0 %v78
    %104 = vmatprep.subr.mxu0 0.0
    %105 = vmatpush1.msra.mxu0 %v79
    %106 = vmatprep.subr.mxu0 0.0
    %107 = vmatpush1.msra.mxu0 %v80
    %108 = vmatprep.subr.mxu0 0.0
    %109 = vmatpush1.msra.mxu0 %v81
    %110 = vmatprep.subr.mxu0 0.0
    %111 = vmatpush1.msra.mxu0 %v82
    %112 = vmatprep.subr.mxu0 0.0
    %113 = vmatpush1.msra.mxu0 %v83
    %114 = vmatprep.subr.mxu0 0.0
    %115 = vmatpush1.msra.mxu0 %v84
    %116 = vmatprep.subr.mxu0 0.0
    %117 = vmatpush1.msra.mxu0 %v85
    %118 = vmatprep.subr.mxu0 0.0
    %119 = vmatpush1.msra.mxu0 %v86
    %120 = vmatprep.subr.mxu0 0.0
    %121 = vmatpush1.msra.mxu0 %v87
    %122 = vmatprep.subr.mxu0 0.0
    %123 = vmatpush1.msra.mxu0 %v88
    %124 = vmatprep.subr.mxu0 0.0
    %125 = vmatpush1.msra.mxu0 %v89
    %126 = vmatprep.subr.mxu0 0.0
    %127 = vmatpush1.msra.mxu0 %v90
    %128 = vmatprep.subr.mxu0 0.0
    %129 = vmatpush1.msra.mxu0 %v91
    %130 = vmatprep.subr.mxu0 0.0
    %131 = vmatpush1.msra.mxu0 %v92
    %132 = vmatprep.subr.mxu0 0.0
    %133 = vmatpush1.msra.mxu0 0.0
    %134 = vmatprep.subr.mxu0 0.0
    %135 = vmatpush1.msra.mxu0 0.0
    %136 = vmatprep.subr.mxu0 0.0
    %137 = vmatpush1.msra.mxu0 0.0
    %138 = vmatprep.subr.mxu0 0.0
    %139 = vmatpush1.msra.mxu0 0.0
    %140 = vmatprep.subr.mxu0 0.0
    %141 = vmatpush1.msra.mxu0 0.0
    %142 = vmatprep.subr.mxu0 0.0
    %143 = vmatpush1.msra.mxu0 0.0
    %144 = vmatprep.subr.mxu0 0.0
    %145 = vmatpush1.msra.mxu0 0.0
    %146 = vmatprep.subr.mxu0 0.0
    %147 = vmatpush1.msra.mxu0 0.0
    %148 = vmatprep.subr.mxu0 0.0
    %149 = vmatpush1.msra.mxu0 0.0
    %150 = vmatprep.subr.mxu0 0.0
    %151 = vmatpush1.msra.mxu0 0.0
    %152 = vmatprep.subr.mxu0 0.0
    %153 = vmatpush1.msra.mxu0 0.0
    %154 = vmatprep.subr.mxu0 0.0
    %155 = vmatpush1.msra.mxu0 0.0
    %156 = vmatprep.subr.mxu0 0.0
    %157 = vmatpush1.msra.mxu0 0.0
    %158 = vmatprep.subr.mxu0 0.0
    %159 = vmatpush1.msra.mxu0 0.0
    %160 = vmatprep.subr.mxu0 0.0
    %161 = vmatpush1.msra.mxu0 0.0
    %162 = vmatprep.subr.mxu0 0.0
    %163 = vmatpush1.msra.mxu0 0.0
    %164 = vmatprep.mubr.f32.mxu0 0.0
    %165 = vmatmul.mubr.f32.gmra.mrb[0].mxu0 %v76
    %v166 = vpop.f32.mrb[0].mxu0
    %v167 = vadd.f32 %v98, %v166
    %v168 = vpop.f32.mrb[0].mxu0
    %169 = vdwg.mxu0
    %v170 = vmax.f32 %v167, 0.0
    %v171 = vld [vmem:[#allocation6] sm:$0xff]
    %v172 = vld [vmem:[#allocation6 + $0x8] sm:$0xff]
    %v173 = vld [vmem:[#allocation6 + $0x10] sm:$0xff]
    %v174 = vld [vmem:[#allocation6 + $0x18] sm:$0xff]
    %v175 = vld [vmem:[#allocation6 + $0x20] sm:$0xff]
    %v176 = vld [vmem:[#allocation6 + $0x28] sm:$0xff]
    %v177 = vld [vmem:[#allocation6 + $0x30] sm:$0xff]
    %v178 = vld [vmem:[#allocation6 + $0x38] sm:$0xff]
    %v179 = vld [vmem:[#allocation6 + $0x40] sm:$0xff]
    %v180 = vld [vmem:[#allocation6 + $0x48] sm:$0xff]
    %v181 = vld [vmem:[#allocation6 + $0x50] sm:$0xff]
    %v182 = vld [vmem:[#allocation6 + $0x58] sm:$0xff]
    %v183 = vld [vmem:[#allocation6 + $0x60] sm:$0xff]
    %v184 = vld [vmem:[#allocation6 + $0x68] sm:$0xff]
    %v185 = vld [vmem:[#allocation6 + $0x70] sm:$0xff]
    %v186 = vld [vmem:[#allocation6 + $0x78] sm:$0xff]
    %v187 = vld [vmem:[%s4] sm:$0x1]
    %v189 = vlaneseq
    %v190 = vshrl.u32 %v189, 7
    %v191 = vsub.s32 0, %v190
    %v192 = vrot.slane %v187, %v191
    %194 = vmatprep.subr.mxu0 0.0
    %195 = vmatpush1.msra.mxu0 %v171
    %196 = vmatprep.subr.mxu0 0.0
    %197 = vmatpush1.msra.mxu0 %v172
    %198 = vmatprep.subr.mxu0 0.0
    %199 = vmatpush1.msra.mxu0 %v173
    %200 = vmatprep.subr.mxu0 0.0
    %201 = vmatpush1.msra.mxu0 %v174
    %202 = vmatprep.subr.mxu0 0.0
    %203 = vmatpush1.msra.mxu0 %v175
    %204 = vmatprep.subr.mxu0 0.0
    %205 = vmatpush1.msra.mxu0 %v176
    %206 = vmatprep.subr.mxu0 0.0
    %207 = vmatpush1.msra.mxu0 %v177
    %208 = vmatprep.subr.mxu0 0.0
    %209 = vmatpush1.msra.mxu0 %v178
    %210 = vmatprep.subr.mxu0 0.0
    %211 = vmatpush1.msra.mxu0 %v179
    %212 = vmatprep.subr.mxu0 0.0
    %213 = vmatpush1.msra.mxu0 %v180
    %214 = vmatprep.subr.mxu0 0.0
    %215 = vmatpush1.msra.mxu0 %v181
    %216 = vmatprep.subr.mxu0 0.0
    %217 = vmatpush1.msra.mxu0 %v182
    %218 = vmatprep.subr.mxu0 0.0
    %219 = vmatpush1.msra.mxu0 %v183
    %220 = vmatprep.subr.mxu0 0.0
    %221 = vmatpush1.msra.mxu0 %v184
    %222 = vmatprep.subr.mxu0 0.0
    %223 = vmatpush1.msra.mxu0 %v185
    %224 = vmatprep.subr.mxu0 0.0
    %225 = vmatpush1.msra.mxu0 %v186
    %226 = vmatprep.subr.mxu0 0.0
    %227 = vmatpush1.msra.mxu0 0.0
    %228 = vmatprep.subr.mxu0 0.0
    %229 = vmatpush1.msra.mxu0 0.0
    %230 = vmatprep.subr.mxu0 0.0
    %231 = vmatpush1.msra.mxu0 0.0
    %232 = vmatprep.subr.mxu0 0.0
    %233 = vmatpush1.msra.mxu0 0.0
    %234 = vmatprep.subr.mxu0 0.0
    %235 = vmatpush1.msra.mxu0 0.0
    %236 = vmatprep.subr.mxu0 0.0
    %237 = vmatpush1.msra.mxu0 0.0
    %238 = vmatprep.subr.mxu0 0.0
    %239 = vmatpush1.msra.mxu0 0.0
    %240 = vmatprep.subr.mxu0 0.0
    %241 = vmatpush1.msra.mxu0 0.0
    %242 = vmatprep.subr.mxu0 0.0
    %243 = vmatpush1.msra.mxu0 0.0
    %244 = vmatprep.subr.mxu0 0.0
    %245 = vmatpush1.msra.mxu0 0.0
    %246 = vmatprep.subr.mxu0 0.0
    %247 = vmatpush1.msra.mxu0 0.0
    %248 = vmatprep.subr.mxu0 0.0
    %249 = vmatpush1.msra.mxu0 0.0
    %250 = vmatprep.subr.mxu0 0.0
    %251 = vmatpush1.msra.mxu0 0.0
    %252 = vmatprep.subr.mxu0 0.0
    %253 = vmatpush1.msra.mxu0 0.0
    %254 = vmatprep.subr.mxu0 0.0
    %255 = vmatpush1.msra.mxu0 0.0
    %256 = vmatprep.subr.mxu0 0.0
    %257 = vmatpush1.msra.mxu0 0.0
    %258 = vmatprep.mubr.f32.mxu0 0.0
    %259 = vmatmul.mubr.f32.gmra.mrb[0].mxu0 %v170
    %v260 = vpop.f32.mrb[0].mxu0
    %v261 = vadd.f32 %v192, %v260
    %v262 = vpop.f32.mrb[0].mxu0
    %263 = vdwg.mxu0
    %v264 = vmax.f32 %v261, 0.0
    %v265 = vld [vmem:[#allocation8] sm:$0xff]
    %v266 = vld [vmem:[#allocation8 + $0x8] sm:$0xff]
    %v267 = vld [vmem:[#allocation8 + $0x10] sm:$0xff]
    %v268 = vld [vmem:[#allocation8 + $0x18] sm:$0xff]
    %v269 = vld [vmem:[#allocation8 + $0x20] sm:$0xff]
    %v270 = vld [vmem:[#allocation8 + $0x28] sm:$0xff]
    %v271 = vld [vmem:[#allocation8 + $0x30] sm:$0xff]
    %v272 = vld [vmem:[#allocation8 + $0x38] sm:$0xff]
    %v273 = vld [vmem:[#allocation8 + $0x40] sm:$0xff]
    %v274 = vld [vmem:[#allocation8 + $0x48] sm:$0xff]
    %v275 = vld [vmem:[#allocation8 + $0x50] sm:$0xff]
    %v276 = vld [vmem:[#allocation8 + $0x58] sm:$0xff]
    %v277 = vld [vmem:[#allocation8 + $0x60] sm:$0xff]
    %v278 = vld [vmem:[#allocation8 + $0x68] sm:$0xff]
    %v279 = vld [vmem:[#allocation8 + $0x70] sm:$0xff]
    %v280 = vld [vmem:[#allocation8 + $0x78] sm:$0xff]
    %v281 = vld [vmem:[%s6] sm:$0x1]
    %v283 = vlaneseq
    %v284 = vshrl.u32 %v283, 7
    %v285 = vsub.s32 0, %v284
    %v286 = vrot.slane %v281, %v285
    %288 = vmatprep.subr.mxu0 0.0
    %289 = vmatpush1.msra.mxu0 %v265
    %290 = vmatprep.subr.mxu0 0.0
    %291 = vmatpush1.msra.mxu0 %v266
    %292 = vmatprep.subr.mxu0 0.0
    %293 = vmatpush1.msra.mxu0 %v267
    %294 = vmatprep.subr.mxu0 0.0
    %295 = vmatpush1.msra.mxu0 %v268
    %296 = vmatprep.subr.mxu0 0.0
    %297 = vmatpush1.msra.mxu0 %v269
    %298 = vmatprep.subr.mxu0 0.0
    %299 = vmatpush1.msra.mxu0 %v270
    %300 = vmatprep.subr.mxu0 0.0
    %301 = vmatpush1.msra.mxu0 %v271
    %302 = vmatprep.subr.mxu0 0.0
    %303 = vmatpush1.msra.mxu0 %v272
    %304 = vmatprep.subr.mxu0 0.0
    %305 = vmatpush1.msra.mxu0 %v273
    %306 = vmatprep.subr.mxu0 0.0
    %307 = vmatpush1.msra.mxu0 %v274
    %308 = vmatprep.subr.mxu0 0.0
    %309 = vmatpush1.msra.mxu0 %v275
    %310 = vmatprep.subr.mxu0 0.0
    %311 = vmatpush1.msra.mxu0 %v276
    %312 = vmatprep.subr.mxu0 0.0
    %313 = vmatpush1.msra.mxu0 %v277
    %314 = vmatprep.subr.mxu0 0.0
    %315 = vmatpush1.msra.mxu0 %v278
    %316 = vmatprep.subr.mxu0 0.0
    %317 = vmatpush1.msra.mxu0 %v279
    %318 = vmatprep.subr.mxu0 0.0
    %319 = vmatpush1.msra.mxu0 %v280
    %320 = vmatprep.subr.mxu0 0.0
    %321 = vmatpush1.msra.mxu0 0.0
    %322 = vmatprep.subr.mxu0 0.0
    %323 = vmatpush1.msra.mxu0 0.0
    %324 = vmatprep.subr.mxu0 0.0
    %325 = vmatpush1.msra.mxu0 0.0
    %326 = vmatprep.subr.mxu0 0.0
    %327 = vmatpush1.msra.mxu0 0.0
    %328 = vmatprep.subr.mxu0 0.0
    %329 = vmatpush1.msra.mxu0 0.0
    %330 = vmatprep.subr.mxu0 0.0
    %331 = vmatpush1.msra.mxu0 0.0
    %332 = vmatprep.subr.mxu0 0.0
    %333 = vmatpush1.msra.mxu0 0.0
    %334 = vmatprep.subr.mxu0 0.0
    %335 = vmatpush1.msra.mxu0 0.0
    %336 = vmatprep.subr.mxu0 0.0
    %337 = vmatpush1.msra.mxu0 0.0
    %338 = vmatprep.subr.mxu0 0.0
    %339 = vmatpush1.msra.mxu0 0.0
    %340 = vmatprep.subr.mxu0 0.0
    %341 = vmatpush1.msra.mxu0 0.0
    %342 = vmatprep.subr.mxu0 0.0
    %343 = vmatpush1.msra.mxu0 0.0
    %344 = vmatprep.subr.mxu0 0.0
    %345 = vmatpush1.msra.mxu0 0.0
    %346 = vmatprep.subr.mxu0 0.0
    %347 = vmatpush1.msra.mxu0 0.0
    %348 = vmatprep.subr.mxu0 0.0
    %349 = vmatpush1.msra.mxu0 0.0
    %350 = vmatprep.subr.mxu0 0.0
    %351 = vmatpush1.msra.mxu0 0.0
    %352 = vmatprep.mubr.f32.mxu0 0.0
    %353 = vmatmul.mubr.f32.gmra.mrb[0].mxu0 %v264
    %v354 = vpop.f32.mrb[0].mxu0
    %v355 = vadd.f32 %v286, %v354
    %v356 = vpop.f32.mrb[0].mxu0
    %357 = vdwg.mxu0
    %v358 = vmax.f32 %v355, 0.0
    %v359 = vld [vmem:[%s7] sm:$0x1]
    %v360 = vld [vmem:[#allocation2] sm:$0x1]
    %362 = vset.pattern.permute.xlu0 0
    %363 = vperm.xlu0 %362, %v360
    %v364 = vpop.permute.xlu0 %363
    %v366 = vlaneseq
    %v367 = vshrl.u32 %v366, 7
    %v368 = vsub.s32 0, %v367
    %v369 = vrot.slane %v364, %v368
    %370 = vmatprep.subr.mxu0 0.0
    %371 = vmatpush1.xpose.msra.mxu0 %v358
    %372 = vmatprep.subr.mxu0 0.0
    %373 = vmatpush1.xpose.msra.mxu0 0.0
    %374 = vmatprep.subr.mxu0 0.0
    %375 = vmatpush1.xpose.msra.mxu0 0.0
    %376 = vmatprep.subr.mxu0 0.0
    %377 = vmatpush1.xpose.msra.mxu0 0.0
    %378 = vmatprep.subr.mxu0 0.0
    %379 = vmatpush1.xpose.msra.mxu0 0.0
    %380 = vmatprep.subr.mxu0 0.0
    %381 = vmatpush1.xpose.msra.mxu0 0.0
    %382 = vmatprep.subr.mxu0 0.0
    %383 = vmatpush1.xpose.msra.mxu0 0.0
    %384 = vmatprep.subr.mxu0 0.0
    %385 = vmatpush1.xpose.msra.mxu0 0.0
    %386 = vmatprep.subr.mxu0 0.0
    %387 = vmatpush1.xpose.msra.mxu0 0.0
    %388 = vmatprep.subr.mxu0 0.0
    %389 = vmatpush1.xpose.msra.mxu0 0.0
    %390 = vmatprep.subr.mxu0 0.0
    %391 = vmatpush1.xpose.msra.mxu0 0.0
    %392 = vmatprep.subr.mxu0 0.0
    %393 = vmatpush1.xpose.msra.mxu0 0.0
    %394 = vmatprep.subr.mxu0 0.0
    %395 = vmatpush1.xpose.msra.mxu0 0.0
    %396 = vmatprep.subr.mxu0 0.0
    %397 = vmatpush1.xpose.msra.mxu0 0.0
    %398 = vmatprep.subr.mxu0 0.0
    %399 = vmatpush1.xpose.msra.mxu0 0.0
    %400 = vmatprep.subr.mxu0 0.0
    %401 = vmatpush1.xpose.msra.mxu0 0.0
    %402 = vmatprep.subr.mxu0 0.0
    %403 = vmatpush1.xpose.msra.mxu0 0.0
    %404 = vmatprep.subr.mxu0 0.0
    %405 = vmatpush1.xpose.msra.mxu0 0.0
    %406 = vmatprep.subr.mxu0 0.0
    %407 = vmatpush1.xpose.msra.mxu0 0.0
    %408 = vmatprep.subr.mxu0 0.0
    %409 = vmatpush1.xpose.msra.mxu0 0.0
    %410 = vmatprep.subr.mxu0 0.0
    %411 = vmatpush1.xpose.msra.mxu0 0.0
    %412 = vmatprep.subr.mxu0 0.0
    %413 = vmatpush1.xpose.msra.mxu0 0.0
    %414 = vmatprep.subr.mxu0 0.0
    %415 = vmatpush1.xpose.msra.mxu0 0.0
    %416 = vmatprep.subr.mxu0 0.0
    %417 = vmatpush1.xpose.msra.mxu0 0.0
    %418 = vmatprep.subr.mxu0 0.0
    %419 = vmatpush1.xpose.msra.mxu0 0.0
    %420 = vmatprep.subr.mxu0 0.0
    %421 = vmatpush1.xpose.msra.mxu0 0.0
    %422 = vmatprep.subr.mxu0 0.0
    %423 = vmatpush1.xpose.msra.mxu0 0.0
    %424 = vmatprep.subr.mxu0 0.0
    %425 = vmatpush1.xpose.msra.mxu0 0.0
    %426 = vmatprep.subr.mxu0 0.0
    %427 = vmatpush1.xpose.msra.mxu0 0.0
    %428 = vmatprep.subr.mxu0 0.0
    %429 = vmatpush1.xpose.msra.mxu0 0.0
    %430 = vmatprep.subr.mxu0 0.0
    %431 = vmatpush1.xpose.msra.mxu0 0.0
    %432 = vmatprep.subr.mxu0 0.0
    %433 = vmatpush1.xpose.msra.mxu0 0.0
    %434 = vmatprep.mubr.f32.mxu0 0.0
    %435 = vmatmul.mubr.f32.gmra.mrb[0].mxu0 %v359
    %v436 = vpop.f32.mrb[0].mxu0
    %v437 = vadd.f32 %v369, %v436
    %v438 = vpop.f32.mrb[0].mxu0
    %439 = vdwg.mxu0
    %vm440 = vcmask 57344
    %441 = vst.msk [vmem:[#allocation9] sm:$0x1] %vm440, %v437
    // Predicated region
    $region50: #{mlp_forward.1} parent=1 // pred_check
      _
    $region51: #{mlp_forward.1} parent=1 // pred_check_branch
      %443 = sbr.rel (0) target = $region53
    $region52: #{mlp_forward.1} parent=1 // pred_region
      %s445 = ssub.s32 16, 16
      %446 = vsyncadd [#allocation5], %s445
      %s448 = sshll.u32 [#allocation9], 4
      %s449 = int_to_ptr.vmem [resolvable:$true] %s448
      %451 = dma.vmem_to_hbm [thread:$0]  %s449, 16, %s9, [#allocation5]
    $region53: #{mlp_forward.1} parent=1 // pred_fallthru
      _
    // Predicated region
    $region54: #{mlp_forward.1} parent=1 // pred_check
      _
    $region55: #{mlp_forward.1} parent=1 // pred_check_branch
      %453 = sbr.rel (0) target = $region57
    $region56: #{mlp_forward.1} parent=1 // pred_region
      %454 = dma.done [#allocation5], 16
    $region57: #{mlp_forward.1} parent=1 // pred_fallthru
      _
    %455 = vsyncpa [#allocation4], 1
    %456 = vsyncpa [#allocation7], 1
    %457 = vsyncpa [#allocation5], 1

</llo_original>
